<compile_context>
chip_gen: v6e
topology: v6e:2x2x1
jax: 0.10.0
libtpu: 0.0.40
codegen_flags: <defaults>
</compile_context>

<pallas_src>
import math
import jax
import jax.numpy as jnp
from jax.experimental import pallas as pl
from jax.experimental.pallas import tpu as pltpu

PAD = 0.0                       # onmt.constants.PAD
ACT_DTYPE = jnp.bfloat16        # HBM-streamed activations / weights (bf16 MXU path)
ROW_BLOCK_TARGET = 256          # sized for v7x (64 MiB VMEM); 512 is fine on v5e/v6e
TIME_BLOCK_TARGET = 32          # timesteps per recurrence grid step
TIME_UNROLL = 4                 # partial unroll of the in-block time loop
_DEFAULT_SCOPED_VMEM = 32 << 20
_VMEM_CAP = 96 << 20            # lower to <= 48 MiB on v7x


# ---------------------------------------------------------------------------
# Small helpers
# ---------------------------------------------------------------------------
def _round_up(x, m):
    return ((x + m - 1) // m) * m


def _row_block(n, target=ROW_BLOCK_TARGET):
    """Largest divisor of n that is <= target and a multiple of 8."""
    start = (min(n, target) // 8) * 8
    for cand in range(start, 7, -8):
        if n % cand == 0:
            return cand
    return min(n, 8)


def _time_block(t_pad, target=TIME_BLOCK_TARGET):
    """Largest divisor of t_pad that is <= target (t_pad is a multiple of 8)."""
    for cand in range(min(t_pad, target), 0, -1):
        if t_pad % cand == 0:
            return cand
    return 1


def _compiler_params(dims, vmem_bytes=0):
    kwargs = dict(dimension_semantics=dims)
    need = int(vmem_bytes) + (2 << 20)          # headroom for compiler-internal scratch
    if need > _DEFAULT_SCOPED_VMEM:
        kwargs["vmem_limit_bytes"] = min(need, _VMEM_CAP)
    return pltpu.CompilerParams(**kwargs)


# ---------------------------------------------------------------------------
# Kernel 1: fused audio_trans + layer-0 input-gate projection.
#   emb       = x_row @ Wa_full + b       (row 0 of Wa_full is zero -> the pad
#                                          indicator column is ignored, i.e.
#                                          input.narrow(2, 1, ...) without a copy)
#   gates_cat = emb_bf16 @ [W_ih_fwd | W_ih_bwd]   -> one wide lane-dense store
# ---------------------------------------------------------------------------
def _emb_gates_kernel(x_ref, wa_ref, b_ref, wih_ref, o_ref):
    emb = jnp.dot(x_ref[...], wa_ref[...], preferred_element_type=jnp.float32)
    emb = (emb + b_ref[...]).astype(ACT_DTYPE)          # emb.type_as(input) analogue
    o_ref[...] = jnp.dot(emb, wih_ref[...],
                         preferred_element_type=jnp.float32).astype(o_ref.dtype)


def emb_gates_pallas(x_rows, wa_full, b_a, wih_cat):
    N, F = x_rows.shape
    H = wa_full.shape[1]
    G = wih_cat.shape[1]                                # 8 * H
    rb = _row_block(N)
    itm = 2
    vmem = 2 * (rb * F * itm + rb * G * itm + F * H * itm + H * 4 + H * G * itm)
    cost = pl.CostEstimate(
        flops=int(2 * N * F * H + 2 * N * H * G),
        transcendentals=0,
        bytes_accessed=int(N * F * itm + N * G * itm + F * H * itm + H * G * itm))
    return pl.pallas_call(
        _emb_gates_kernel,
        out_shape=jax.ShapeDtypeStruct((N, G), ACT_DTYPE),
        grid=(N // rb,),
        in_specs=[
            pl.BlockSpec((rb, F), lambda r: (r, 0)),
            pl.BlockSpec((F, H), lambda r: (0, 0)),
            pl.BlockSpec((1, H), lambda r: (0, 0)),
            pl.BlockSpec((H, G), lambda r: (0, 0)),
        ],
        out_specs=pl.BlockSpec((rb, G), lambda r: (r, 0)),
        compiler_params=_compiler_params(("parallel",), vmem),
        cost_estimate=cost,
    )(x_rows, wa_full, b_a, wih_cat)


# ---------------------------------------------------------------------------
# Kernel 2: layer-l (l > 0) input-gate projection from previous (fwd, bwd) states.
#   gates_cat = fwd_prev @ W_f_cat + bwd_prev @ W_b_cat    (W_*_cat are (H, 8H))
# ---------------------------------------------------------------------------
def _dual_gates_kernel(hf_ref, hb_ref, wf_ref, wb_ref, o_ref):
    g = jnp.dot(hf_ref[...], wf_ref[...], preferred_element_type=jnp.float32)
    g = g + jnp.dot(hb_ref[...], wb_ref[...], preferred_element_type=jnp.float32)
    o_ref[...] = g.astype(o_ref.dtype)


def dual_gates_pallas(h_fwd, h_bwd, w_f, w_b):
    N, H = h_fwd.shape
    G = w_f.shape[1]                                     # 8 * H
    rb = _row_block(N)
    itm = 2
    vmem = 2 * (2 * rb * H * itm + rb * G * itm + 2 * H * G * itm)
    cost = pl.CostEstimate(
        flops=int(4 * N * H * G),
        transcendentals=0,
        bytes_accessed=int(2 * N * H * itm + N * G * itm + 2 * H * G * itm))
    return pl.pallas_call(
        _dual_gates_kernel,
        out_shape=jax.ShapeDtypeStruct((N, G), ACT_DTYPE),
        grid=(N // rb,),
        in_specs=[
            pl.BlockSpec((rb, H), lambda r: (r, 0)),
            pl.BlockSpec((rb, H), lambda r: (r, 0)),
            pl.BlockSpec((H, G), lambda r: (0, 0)),
            pl.BlockSpec((H, G), lambda r: (0, 0)),
        ],
        out_specs=pl.BlockSpec((rb, G), lambda r: (r, 0)),
        compiler_params=_compiler_params(("parallel",), vmem),
        cost_estimate=cost,
    )(h_fwd, h_bwd, w_f, w_b)


# ---------------------------------------------------------------------------
# Kernel 3: fused bidirectional LSTM recurrence (bias=False, packed-sequence
# semantics: masked steps carry h/c and emit zeros, like pad_packed_sequence).
# Both directions run interleaved inside one body; the backward direction's
# global time reversal is folded into the index_maps + in-block index.
# W_hh is DMA'd once from HBM into a single-buffered VMEM scratch.
# ---------------------------------------------------------------------------
def _lstm_cell(gates, c, H):
    # PyTorch gate order: i, f, g, o
    i_g = jax.nn.sigmoid(gates[:, 0 * H:1 * H])
    f_g = jax.nn.sigmoid(gates[:, 1 * H:2 * H])
    g_g = jnp.tanh(gates[:, 2 * H:3 * H])
    o_g = jax.nn.sigmoid(gates[:, 3 * H:4 * H])
    c_new = f_g * c + i_g * g_g
    h_new = o_g * jnp.tanh(c_new)
    return h_new, c_new


def _bilstm_kernel(gxf_ref, gxb_ref, mf_ref, mb_ref, whh_hbm,
                   of_ref, ob_ref, whh_vmem, h_sc, c_sc, dma_sem):
    @pl.when(pl.program_id(0) == 0)
    def _():
        cp = pltpu.make_async_copy(whh_hbm, whh_vmem, dma_sem)
        cp.start()
        cp.wait()
        h_sc[...] = jnp.zeros_like(h_sc)
        c_sc[...] = jnp.zeros_like(c_sc)

    TT = gxf_ref.shape[0]
    H = h_sc.shape[-1]
    w_f = whh_vmem[0]                       # resident bf16 W_hh, loaded once per block
    w_b = whh_vmem[1]

    def step(s, carry):
        sb = TT - 1 - s                     # backward direction walks the block in reverse
        h_f, c_f = h_sc[0], c_sc[0]
        h_b, c_b = h_sc[1], c_sc[1]
        # two independent chains -> MXU dot of one overlaps EUP/VPU of the other
        g_f = gxf_ref[s].astype(jnp.float32) + jnp.dot(
            h_f.astype(w_f.dtype), w_f, preferred_element_type=jnp.float32)
        g_b = gxb_ref[sb].astype(jnp.float32) + jnp.dot(
            h_b.astype(w_b.dtype), w_b, preferred_element_type=jnp.float32)
        hf_new, cf_new = _lstm_cell(g_f, c_f, H)
        hb_new, cb_new = _lstm_cell(g_b, c_b, H)
        m_f = mf_ref[s] > 0.0               # (B, 1) bool validity mask
        m_b = mb_ref[sb] > 0.0
        h_sc[0] = jnp.where(m_f, hf_new, h_f)        # padded steps carry state
        c_sc[0] = jnp.where(m_f, cf_new, c_f)
        h_sc[1] = jnp.where(m_b, hb_new, h_b)
        c_sc[1] = jnp.where(m_b, cb_new, c_b)
        of_ref[s] = jnp.where(m_f, hf_new, 0.0).astype(of_ref.dtype)   # pad -> 0
        ob_ref[sb] = jnp.where(m_b, hb_new, 0.0).astype(ob_ref.dtype)
        return carry

    jax.lax.fori_loop(0, TT, step, 0, unroll=min(TIME_UNROLL, TT))


def bilstm_pallas(gates, mask, w_hh):
    T, B, G = gates.shape                   # G == 8*H : [fwd gates | bwd gates]
    H = G // 8
    TT = _time_block(T)
    n_tb = T // TT
    itm = 2
    vmem = (2 * (2 * TT * B * 4 * H * itm + 2 * TT * B * 4 + 2 * TT * B * H * itm)
            + 2 * H * 4 * H * itm + 2 * 2 * B * H * 4)
    cost = pl.CostEstimate(
        flops=int(2 * 2 * T * B * H * 4 * H),
        transcendentals=int(2 * T * B * 5 * H),
        bytes_accessed=int(T * B * G * itm + 2 * T * B * H * itm
                           + 2 * T * B * 4 + 2 * H * 4 * H * itm))

    def fwd_map(tb):
        return (tb, 0, 0)

    def bwd_gate_map(tb):
        return (n_tb - 1 - tb, 0, 1)        # reversed time blocks, bwd lane half

    def bwd_map(tb):
        return (n_tb - 1 - tb, 0, 0)

    out_f, out_b = pl.pallas_call(
        _bilstm_kernel,
        out_shape=(jax.ShapeDtypeStruct((T, B, H), ACT_DTYPE),
                   jax.ShapeDtypeStruct((T, B, H), ACT_DTYPE)),
        grid=(n_tb,),
        in_specs=[
            pl.BlockSpec((TT, B, 4 * H), fwd_map),        # fwd gate pre-acts
            pl.BlockSpec((TT, B, 4 * H), bwd_gate_map),   # bwd gate pre-acts
            pl.BlockSpec((TT, B, 1), fwd_map),
            pl.BlockSpec((TT, B, 1), bwd_map),
            pl.BlockSpec(memory_space=pl.ANY),            # W_hh in HBM, manual single-buffer DMA
        ],
        out_specs=(pl.BlockSpec((TT, B, H), fwd_map),
                   pl.BlockSpec((TT, B, H), bwd_map)),
        scratch_shapes=[
            pltpu.VMEM((2, H, 4 * H), w_hh.dtype),        # resident W_hh (fwd, bwd)
            pltpu.VMEM((2, B, H), jnp.float32),           # h (fwd, bwd)
            pltpu.VMEM((2, B, H), jnp.float32),           # c (fwd, bwd)
            pltpu.SemaphoreType.DMA(()),
        ],
        compiler_params=_compiler_params(("arbitrary",), vmem),
        cost_estimate=cost,
    )(gates, gates, mask, mask, w_hh)
    return out_f, out_b


# ---------------------------------------------------------------------------
# Kernel 4: fused bidirectional sum + LayerNorm (postprocess_layer, sequence='n')
# ---------------------------------------------------------------------------
def _add_layernorm_kernel(f_ref, b_ref, g_ref, beta_ref, o_ref):
    x = f_ref[...].astype(jnp.float32) + b_ref[...].astype(jnp.float32)
    mean = jnp.mean(x, axis=-1, keepdims=True)
    cent = x - mean
    var = jnp.mean(cent * cent, axis=-1, keepdims=True)
    y = cent * jax.lax.rsqrt(var + 1e-5) * g_ref[...] + beta_ref[...]
    o_ref[...] = y.astype(o_ref.dtype)


def add_layernorm_pallas(h_fwd, h_bwd, gamma, beta, out_dtype):
    N, H = h_fwd.shape
    rb = _row_block(N)
    itm = 2
    ob = jnp.dtype(out_dtype).itemsize
    vmem = 2 * (2 * rb * H * itm + rb * H * ob + 2 * H * 4)
    cost = pl.CostEstimate(flops=int(10 * N * H), transcendentals=int(N),
                           bytes_accessed=int(2 * N * H * itm + N * H * ob))
    return pl.pallas_call(
        _add_layernorm_kernel,
        out_shape=jax.ShapeDtypeStruct((N, H), out_dtype),
        grid=(N // rb,),
        in_specs=[
            pl.BlockSpec((rb, H), lambda r: (r, 0)),
            pl.BlockSpec((rb, H), lambda r: (r, 0)),
            pl.BlockSpec((1, H), lambda r: (0, 0)),
            pl.BlockSpec((1, H), lambda r: (0, 0)),
        ],
        out_specs=pl.BlockSpec((rb, H), lambda r: (r, 0)),
        compiler_params=_compiler_params(("parallel",), vmem),
        cost_estimate=cost,
    )(h_fwd, h_bwd, gamma, beta)


# ---------------------------------------------------------------------------
# Parameter construction.  PyTorch stores weight_ih / weight_hh as (4H, Din) /
# (4H, H); transpose to (Din, 4H) / (H, 4H) when loading real checkpoints, then
# pack exactly as below (per-direction W_ih concatenated along the output/lane
# axis; W_hh stacked on a leading direction axis).  nn.LSTM here has bias=False.
# ---------------------------------------------------------------------------
def init_params(key, feature_size, model_size, num_layers):
    H = model_size
    keys = jax.random.split(key, 2 + num_layers * 4)
    xav = math.sqrt(6.0 / (feature_size + H))
    w_a = jax.random.uniform(keys[0], (feature_size, H), jnp.float32, -xav, xav)
    # zero first row kills the pad-indicator column of the raw input
    wa_full = jnp.concatenate([jnp.zeros((1, H), jnp.float32), w_a], axis=0)
    blim = 1.0 / math.sqrt(feature_size)
    b_a = jax.random.uniform(keys[1], (1, H), jnp.float32, -blim, blim)

    k = 1.0 / math.sqrt(H)
    idx = 2
    layers = []
    for layer in range(num_layers):
        din = H if layer == 0 else 2 * H
        w_ih, w_hh = [], []
        for _d in range(2):                              # 0: fwd, 1: bwd
            w_ih.append(jax.random.uniform(keys[idx], (din, 4 * H), jnp.float32, -k, k)); idx += 1
            w_hh.append(jax.random.uniform(keys[idx], (H, 4 * H), jnp.float32, -k, k)); idx += 1
        w_hh = jnp.stack(w_hh).astype(ACT_DTYPE)                                   # (2, H, 4H)
        if layer == 0:
            layers.append({"w_ih_cat": jnp.concatenate(w_ih, axis=1).astype(ACT_DTYPE),   # (H, 8H)
                           "w_hh": w_hh})
        else:
            # rows [0:H] multiply fwd_prev, rows [H:2H] multiply bwd_prev
            w_f = jnp.concatenate([w[:H, :] for w in w_ih], axis=1).astype(ACT_DTYPE)     # (H, 8H)
            w_b = jnp.concatenate([w[H:, :] for w in w_ih], axis=1).astype(ACT_DTYPE)     # (H, 8H)
            layers.append({"w_ih_f": w_f, "w_ih_b": w_b, "w_hh": w_hh})

    return {"wa_full": wa_full.astype(ACT_DTYPE), "b_a": b_a, "layers": layers,
            "gamma": jnp.ones((1, H), jnp.float32),      # nn.LayerNorm default affine init
            "beta": jnp.zeros((1, H), jnp.float32)}


# ---------------------------------------------------------------------------
# Forward pass
# ---------------------------------------------------------------------------
def speech_lstm_encoder_forward(x, params):
    """x: (B, T, feature_size + 1); column 0 is the pad indicator (> PAD == valid)."""
    B, T, F1 = x.shape
    H = params["gamma"].shape[-1]
    assert H % 32 == 0, "model_size must be a multiple of 32 (lane-aligned 4H gate slices)"

    mask_src = x[:, :, 0] > PAD                                    # (B, T), module's src_mask

    # Time-major once; pad B to a sublane multiple and T to a time-block multiple.
    # Padded rows/steps have pad indicator 0 -> mask False -> zero outputs, sliced away.
    x_t = jnp.transpose(x, (1, 0, 2))                              # (T, B, F1)
    B_p = _round_up(max(B, 8), 8)
    T_p = _round_up(T, 8)
    TT = _time_block(T_p)
    if (T_p, B_p) != (T, B):
        x_t = jnp.pad(x_t, ((0, T_p - T), (0, B_p - B), (0, 0)))

    m = (x_t[:, :, 0:1] > PAD).astype(jnp.float32)                 # (T_p, B_p, 1) validity mask
    # NOTE: packed-sequence semantics assume padding is at the tail of each sequence.
    N = T_p * B_p
    x_rows = x_t.astype(ACT_DTYPE).reshape(N, F1)

    # audio_trans fused with the layer-0 input projection -> (N, 8H) bf16 gate pre-acts
    gates = emb_gates_pallas(x_rows, params["wa_full"], params["b_a"],
                             params["layers"][0]["w_ih_cat"])

    h_fwd = h_bwd = None
    for l, layer in enumerate(params["layers"]):
        if l > 0:
            gates = dual_gates_pallas(h_fwd.reshape(N, H), h_bwd.reshape(N, H),
                                      layer["w_ih_f"], layer["w_ih_b"])
        h_fwd, h_bwd = bilstm_pallas(gates.reshape(T_p, B_p, 8 * H), m, layer["w_hh"])
        # TODO(synk): nn.LSTM inter-layer dropout is train-mode only; eval semantics implemented.

    out = add_layernorm_pallas(h_fwd.reshape(N, H), h_bwd.reshape(N, H),
                               params["gamma"], params["beta"], x.dtype)
    context = out.reshape(T_p, B_p, H)[:T, :B]                     # == seq.transpose(0, 1)
    return {"context": context, "src_mask": mask_src}
    # TODO(synk): external initial hidden state `hid` is assumed None (zero init).


if __name__ == "__main__":
    B, T, FEAT, H, LAYERS = 2, 8, 40, 32, 2                        # input has FEAT + 1 columns
    key = jax.random.PRNGKey(0)
    kp, kx = jax.random.split(key)
    params = init_params(kp, FEAT, H, LAYERS)

    # deterministic input: column 0 is the pad indicator (> PAD for valid frames)
    lengths = jnp.array([T, 5])
    valid = (jnp.arange(T)[None, :] < lengths[:, None]).astype(jnp.float32)     # (B, T)
    feats = jax.random.normal(kx, (B, T, FEAT), jnp.float32) * valid[:, :, None]
    x = jnp.concatenate([valid[:, :, None], feats], axis=-1)                    # (B, T, 41)

    out = speech_lstm_encoder_forward(x, params)
    ctx = jax.block_until_ready(out["context"])
    assert ctx.shape == (T, B, H)
    assert out["src_mask"].shape == (B, T)
    assert bool(jnp.all(jnp.isfinite(ctx)))
    print("KERNEL_OK")
</pallas_src>

<mosaic_0001>
module attributes {stable_mosaic.version = 11 : i64} {
  func.func @_emb_gates_kernel(%arg0: i32, %arg1: memref<64x41xbf16, #tpu.memory_space<vmem>>, %arg2: memref<41x32xbf16, #tpu.memory_space<vmem>>, %arg3: memref<1x32xf32, #tpu.memory_space<vmem>>, %arg4: memref<32x256xbf16, #tpu.memory_space<vmem>>, %arg5: memref<64x256xbf16, #tpu.memory_space<vmem>>) attributes {dimension_semantics = [#tpu.dimension_semantics<parallel>], iteration_bounds = array<i64: 1>, scalar_prefetch = 0 : i64, scratch_operands = 0 : i64, tpu.core_type = #tpu.core_type<tc>, window_params = [{transform_indices = @transform_0, window_bounds = array<i64: 64, 41>}, {pipeline_mode = #tpu.pipeline_mode<synchronous>, transform_indices = @transform_1, window_bounds = array<i64: 41, 32>}, {pipeline_mode = #tpu.pipeline_mode<synchronous>, transform_indices = @transform_2, window_bounds = array<i64: 1, 32>}, {pipeline_mode = #tpu.pipeline_mode<synchronous>, transform_indices = @transform_3, window_bounds = array<i64: 32, 256>}, {transform_indices = @transform_4, window_bounds = array<i64: 64, 256>}]} {
    %c0 = arith.constant 0 : index
    %c0_0 = arith.constant 0 : index
    %0 = vector.load %arg1[%c0, %c0_0] : memref<64x41xbf16, #tpu.memory_space<vmem>>, vector<64x41xbf16>
    %c0_1 = arith.constant 0 : index
    %c0_2 = arith.constant 0 : index
    %1 = vector.load %arg2[%c0_1, %c0_2] : memref<41x32xbf16, #tpu.memory_space<vmem>>, vector<41x32xbf16>
    %cst = arith.constant dense<0.000000e+00> : vector<64x32xf32>
    %2 = tpu.matmul %0, %1, %cst {dimension_numbers = #tpu.dot_dimension_numbers<[1], [0], [0], [1], [0, 0, 1, 1], [], []>} : vector<64x41xbf16>, vector<41x32xbf16>, vector<64x32xf32> -> vector<64x32xf32>
    %c0_3 = arith.constant 0 : index
    %c0_4 = arith.constant 0 : index
    %3 = vector.load %arg3[%c0_3, %c0_4] : memref<1x32xf32, #tpu.memory_space<vmem>>, vector<1x32xf32>
    %4 = vector.broadcast %3 : vector<1x32xf32> to vector<64x32xf32>
    %5 = arith.addf %2, %4 : vector<64x32xf32>
    %6 = arith.truncf %5 : vector<64x32xf32> to vector<64x32xbf16>
    %c0_5 = arith.constant 0 : index
    %c0_6 = arith.constant 0 : index
    %7 = vector.load %arg4[%c0_5, %c0_6] : memref<32x256xbf16, #tpu.memory_space<vmem>>, vector<32x256xbf16>
    %cst_7 = arith.constant dense<0.000000e+00> : vector<64x256xf32>
    %8 = tpu.matmul %6, %7, %cst_7 {dimension_numbers = #tpu.dot_dimension_numbers<[1], [0], [0], [1], [0, 0, 1, 1], [], []>} : vector<64x32xbf16>, vector<32x256xbf16>, vector<64x256xf32> -> vector<64x256xf32>
    %9 = arith.truncf %8 : vector<64x256xf32> to vector<64x256xbf16>
    %c0_8 = arith.constant 0 : index
    %c0_9 = arith.constant 0 : index
    %10 = vector.load %arg5[%c0_8, %c0_9] : memref<64x256xbf16, #tpu.memory_space<vmem>>, vector<64x256xbf16>
    tpu.vector_store %arg5[%c0_8, %c0_9], %9 {strides = array<i32>} : memref<64x256xbf16, #tpu.memory_space<vmem>>, vector<64x256xbf16>,
    return
  }
  func.func @transform_0(%arg0: i32) -> (i32, i32) {
    %c0_i32 = arith.constant 0 : i32
    %c0_i32_0 = arith.constant 0 : i32
    return %arg0, %c0_i32 : i32, i32
  }
  func.func @transform_1(%arg0: i32) -> (i32, i32) {
    %c0_i32 = arith.constant 0 : i32
    %c0_i32_0 = arith.constant 0 : i32
    %c0_i32_1 = arith.constant 0 : i32
    return %c0_i32, %c0_i32_0 : i32, i32
  }
  func.func @transform_2(%arg0: i32) -> (i32, i32) {
    %c0_i32 = arith.constant 0 : i32
    %c0_i32_0 = arith.constant 0 : i32
    %c0_i32_1 = arith.constant 0 : i32
    return %c0_i32, %c0_i32_0 : i32, i32
  }
  func.func @transform_3(%arg0: i32) -> (i32, i32) {
    %c0_i32 = arith.constant 0 : i32
    %c0_i32_0 = arith.constant 0 : i32
    %c0_i32_1 = arith.constant 0 : i32
    return %c0_i32, %c0_i32_0 : i32, i32
  }
  func.func @transform_4(%arg0: i32) -> (i32, i32) {
    %c0_i32 = arith.constant 0 : i32
    %c0_i32_0 = arith.constant 0 : i32
    return %arg0, %c0_i32 : i32, i32
  }
}

</mosaic_0001>

<llo_original>
// kernel: tpu_custom_call.1
$region0: #{tpu_custom_call.1}
  #allocation0 [shape = 'u32[]', space=smem, size = 0x4, offset = 0x4, fixed_abs, tag = 'smem constant byte address 0x4 - core index']
  #allocation1 [shape = 'u32[144,128]{1,0:T(1,128)}', space=vmem, size = 0x12000, scoped, tag = 'internal scratch']
  %s0 = inlined_call_operand.vmem [shape: bf16[64,41], index: 0, kind: input, shape index: {}]
  %s1 = inlined_call_operand.vmem [shape: bf16[41,32], index: 1, kind: input, shape index: {}]
  %s2 = inlined_call_operand.vmem [shape: f32[1,32], index: 2, kind: input, shape index: {}]
  %s3 = inlined_call_operand.vmem [shape: bf16[32,256], index: 3, kind: input, shape index: {}]
  %s4 = inlined_call_operand.hbm [shape: bf16[64,256], index: 4, kind: output, shape index: {}]
  %s5 = sld [smem:[#allocation0]]
  $region26: #{tpu_custom_call.1} parent=0
    _
  %s7 = ssub.s32 1, %s5
  %s8 = scalar_select 0, %s7, %s5
  $region1: #{tpu_custom_call.1} parent=0
    #allocation2 [shape = 'u8[32768]{0}', space=vmem, size = 0x8000, scoped, tag = 'output window, operand 0, single buffered']
    #allocation3 [shape = 's32[1]{0}', space=sflag, size = 0x4, scoped, tag = 'scoped memory for tpu_custom_call.1']
    %9 = vsyncpa [#allocation3], 0
    // Predicated region
    $region2: #{tpu_custom_call.1} parent=1 // pred_check
      _
    $region3: #{tpu_custom_call.1} parent=1 // pred_check_branch
      %11 = sbr.rel (0) target = $region5
    $region4: #{tpu_custom_call.1} parent=1 // pred_region
      _
    $region5: #{tpu_custom_call.1} parent=1 // pred_fallthru
      _
    // Predicated region
    $region6: #{tpu_custom_call.1} parent=1 // pred_check
      _
    $region7: #{tpu_custom_call.1} parent=1 // pred_check_branch
      %13 = sbr.rel (0) target = $region9
    $region8: #{tpu_custom_call.1} parent=1 // pred_region
      _
    $region9: #{tpu_custom_call.1} parent=1 // pred_fallthru
      _
    // Predicated region
    $region10: #{tpu_custom_call.1} parent=1 // pred_check
      _
    $region11: #{tpu_custom_call.1} parent=1 // pred_check_branch
      %15 = sbr.rel (0) target = $region13
    $region12: #{tpu_custom_call.1} parent=1 // pred_region
      _
    $region13: #{tpu_custom_call.1} parent=1 // pred_fallthru
      _
    // Predicated region
    $region14: #{tpu_custom_call.1} parent=1 // pred_check
      _
    $region15: #{tpu_custom_call.1} parent=1 // pred_check_branch
      %17 = sbr.rel (0) target = $region17
    $region16: #{tpu_custom_call.1} parent=1 // pred_region
      _
    $region17: #{tpu_custom_call.1} parent=1 // pred_fallthru
      _
    %v19 = vld [vmem:[%s0] sm:$0xf]
    %v20 = vld [vmem:[%s0 + $0x4] sm:$0xf]
    %v21 = vld [vmem:[%s0 + $0x8] sm:$0xf]
    %v22 = vld [vmem:[%s0 + $0xc] sm:$0xf]
    %v23 = vld [vmem:[%s0 + $0x10] sm:$0xf]
    %v24 = vld [vmem:[%s0 + $0x14] sm:$0xf]
    %v25 = vld [vmem:[%s0 + $0x18] sm:$0xf]
    %v26 = vld [vmem:[%s0 + $0x1c] sm:$0xf]
    %v27 = vld [vmem:[%s1] sm:$0xf]
    %v28 = vld [vmem:[%s1 + $0x4] sm:$0xf]
    %v29 = vld [vmem:[%s1 + $0x8] sm:$0xf]
    %v30 = vld [vmem:[%s1 + $0xc] sm:$0xf]
    %v31 = vld [vmem:[%s1 + $0x10] sm:$0xf]
    %v32 = vld [vmem:[%s1 + $0x14] sm:$0x1]
    %v33 = vld [vmem:[%s2] sm:$0x1]
    %v35 = vlaneseq
    %v36 = vshrl.u32 %v35, 7
    %v37 = vsub.s32 0, %v36
    %v38 = vrot.slane %v33, %v37
    %v48 = vunpack.c.l.b16 %v19
    %v49 = vunpack.c.l.b16 %v20
    %v50 = vunpack.c.l.b16 %v21
    %v51 = vunpack.c.l.b16 %v22
    %v52 = vunpack.c.l.b16 %v23
    %v53 = vunpack.c.l.b16 %v24
    %v54 = vunpack.c.l.b16 %v25
    %v55 = vunpack.c.l.b16 %v26
    %v56 = vpack.c.b16 %v49, %v48
    %v57 = vpack.c.b16 %v51, %v50
    %v58 = vpack.c.b16 %v53, %v52
    %v59 = vpack.c.b16 %v55, %v54
    %v66 = vunpack.c.l.b16 %v27
    %v67 = vunpack.c.l.b16 %v28
    %v68 = vunpack.c.l.b16 %v29
    %v69 = vunpack.c.l.b16 %v30
    %v70 = vunpack.c.l.b16 %v31
    %v71 = vunpack.c.l.b16 %v32
    %v72 = vpack.c.b16 %v67, %v66
    %v73 = vpack.c.b16 %v69, %v68
    %v74 = vpack.c.b16 %v71, %v70
    %vm77 = vcmask 334848
    %v79 = vsel %vm77, %v56, 0
    %v82 = vsel %vm77, %v57, 0
    %v85 = vsel %vm77, %v58, 0
    %v88 = vsel %vm77, %v59, 0
    %vm90 = vcmask 1043456
    %vm91 = vcmask 1044480
    %v92 = vsel %vm90, 4294967295, 65535
    %v93 = vsel %vm91, %v92, 0
    %v95 = vand.u32 %v74, %v93
    %97 = vmatprep.subr.bf16.mxu0 0
    %98 = vmatpush1.bf16.msra.mxu0 0
    %99 = vmatprep.subr.bf16.mxu0 0
    %100 = vmatpush1.bf16.msra.mxu0 0
    %101 = vmatprep.subr.bf16.mxu0 0
    %102 = vmatpush1.bf16.msra.mxu0 0
    %103 = vmatprep.subr.bf16.mxu0 0
    %104 = vmatpush1.bf16.msra.mxu0 0
    %105 = vmatprep.subr.bf16.mxu0 0
    %106 = vmatpush1.bf16.msra.mxu0 0
    %107 = vmatprep.subr.bf16.mxu0 0
    %108 = vmatpush1.bf16.msra.mxu0 %v95
    %109 = vmatprep.subr.bf16.mxu0 0
    %110 = vmatpush1.bf16.msra.mxu0 %v73
    %111 = vmatprep.subr.bf16.mxu0 0
    %112 = vmatpush1.bf16.msra.mxu0 %v72
    %113 = vmatprep.subr.bf16.mxu0 0
    %114 = vmatpush2.bf16.msra.mxu0 0
    %115 = vmatprep.subr.bf16.mxu0 0
    %116 = vmatpush2.bf16.msra.mxu0 0
    %117 = vmatprep.subr.bf16.mxu0 0
    %118 = vmatpush2.bf16.msra.mxu0 0
    %119 = vmatprep.subr.bf16.mxu0 0
    %120 = vmatpush2.bf16.msra.mxu0 0
    %121 = vmatprep.subr.bf16.mxu0 0
    %122 = vmatpush2.bf16.msra.mxu0 0
    %123 = vmatprep.subr.bf16.mxu0 0
    %124 = vmatpush2.bf16.msra.mxu0 0
    %125 = vmatprep.subr.bf16.mxu0 0
    %126 = vmatpush2.bf16.msra.mxu0 0
    %127 = vmatprep.subr.bf16.mxu0 0
    %128 = vmatpush2.bf16.msra.mxu0 0
    %129 = vmatprep.mubr.bf16.mxu0 0
    %130 = vmatmul.mubr.bf16.gmra.mxu0 %v79
    %v131 = vpop.f32.mrf.mxu0
    %v132 = vadd.f32 %v38, %v131
    %v133 = vpop.f32.mrf.mxu0
    %v134 = vpop.f32.mrf.mxu0
    %v135 = vadd.f32 %v38, %v134
    %v136 = vpop.f32.mrf.mxu0
    %137 = vmatprep.mubr.bf16.mxu0 0
    %138 = vmatmul.mubr.bf16.gmra.mxu0 %v82
    %v139 = vpop.f32.mrf.mxu0
    %v140 = vadd.f32 %v38, %v139
    %v141 = vpop.f32.mrf.mxu0
    %v142 = vpop.f32.mrf.mxu0
    %v143 = vadd.f32 %v38, %v142
    %v144 = vpop.f32.mrf.mxu0
    %145 = vmatprep.mubr.bf16.mxu0 0
    %146 = vmatmul.mubr.bf16.gmra.mxu0 %v85
    %v147 = vpop.f32.mrf.mxu0
    %v148 = vadd.f32 %v38, %v147
    %v149 = vpop.f32.mrf.mxu0
    %v150 = vpop.f32.mrf.mxu0
    %v151 = vadd.f32 %v38, %v150
    %v152 = vpop.f32.mrf.mxu0
    %153 = vmatprep.mubr.bf16.mxu0 0
    %154 = vmatmul.mubr.bf16.gmra.mxu0 %v88
    %v155 = vpop.f32.mrf.mxu0
    %v156 = vadd.f32 %v38, %v155
    %v157 = vpop.f32.mrf.mxu0
    %v158 = vpop.f32.mrf.mxu0
    %v159 = vadd.f32 %v38, %v158
    %v160 = vpop.f32.mrf.mxu0
    %161 = vdwg.mxu0
    %v162 = vpack.c.bf16 %v135, %v132
    %v163 = vpack.c.bf16 %v143, %v140
    %v164 = vpack.c.bf16 %v151, %v148
    %v165 = vpack.c.bf16 %v159, %v156
    %v166 = vld [vmem:[%s3] sm:$0xff]
    %v167 = vld [vmem:[%s3 + $0x8] sm:$0xff]
    %v168 = vld [vmem:[%s3 + $0x10] sm:$0xff]
    %v169 = vld [vmem:[%s3 + $0x18] sm:$0xff]
    %v174 = vunpack.c.l.b16 %v166
    %v175 = vunpack.c.h.b16 %v166
    %v176 = vunpack.c.l.b16 %v167
    %v177 = vunpack.c.h.b16 %v167
    %v178 = vunpack.c.l.b16 %v168
    %v179 = vunpack.c.h.b16 %v168
    %v180 = vunpack.c.l.b16 %v169
    %v181 = vunpack.c.h.b16 %v169
    %v182 = vpack.c.b16 %v176, %v174
    %v183 = vpack.c.b16 %v177, %v175
    %v184 = vpack.c.b16 %v180, %v178
    %v185 = vpack.c.b16 %v181, %v179
    %vm190 = vcmask 261120
    %v192 = vsel %vm190, %v162, 0
    %v195 = vsel %vm190, %v163, 0
    %v198 = vsel %vm190, %v164, 0
    %v201 = vsel %vm190, %v165, 0
    %203 = vmatprep.subr.bf16.mxu0 0
    %204 = vmatpush1.bf16.msra.mxu0 0
    %205 = vmatprep.subr.bf16.mxu0 0
    %206 = vmatpush1.bf16.msra.mxu0 0
    %207 = vmatprep.subr.bf16.mxu0 0
    %208 = vmatpush1.bf16.msra.mxu0 0
    %209 = vmatprep.subr.bf16.mxu0 0
    %210 = vmatpush1.bf16.msra.mxu0 0
    %211 = vmatprep.subr.bf16.mxu0 0
    %212 = vmatpush1.bf16.msra.mxu0 0
    %213 = vmatprep.subr.bf16.mxu0 0
    %214 = vmatpush1.bf16.msra.mxu0 0
    %215 = vmatprep.subr.bf16.mxu0 %v185
    %216 = vmatpush1.bf16.msra.mxu0 %v184
    %217 = vmatprep.subr.bf16.mxu0 %v183
    %218 = vmatpush1.bf16.msra.mxu0 %v182
    %219 = vmatprep.subr.bf16.mxu0 0
    %220 = vmatpush2.bf16.msra.mxu0 0
    %221 = vmatprep.subr.bf16.mxu0 0
    %222 = vmatpush2.bf16.msra.mxu0 0
    %223 = vmatprep.subr.bf16.mxu0 0
    %224 = vmatpush2.bf16.msra.mxu0 0
    %225 = vmatprep.subr.bf16.mxu0 0
    %226 = vmatpush2.bf16.msra.mxu0 0
    %227 = vmatprep.subr.bf16.mxu0 0
    %228 = vmatpush2.bf16.msra.mxu0 0
    %229 = vmatprep.subr.bf16.mxu0 0
    %230 = vmatpush2.bf16.msra.mxu0 0
    %231 = vmatprep.subr.bf16.mxu0 0
    %232 = vmatpush2.bf16.msra.mxu0 0
    %233 = vmatprep.subr.bf16.mxu0 0
    %234 = vmatpush2.bf16.msra.mxu0 0
    %235 = vmatprep.mubr.bf16.mxu0 0
    %236 = vmatmul.mubr.bf16.gmra.mxu0 %v192
    %v237 = vpop.f32.mrf.mxu0
    %v238 = vadd.f32 0.0, %v237
    %v239 = vpop.f32.mrf.mxu0
    %v240 = vadd.f32 0.0, %v239
    %v241 = vpop.f32.mrf.mxu0
    %v242 = vadd.f32 0.0, %v241
    %v243 = vpop.f32.mrf.mxu0
    %v244 = vadd.f32 0.0, %v243
    %245 = vmatprep.mubr.bf16.mxu0 0
    %246 = vmatmul.mubr.bf16.gmra.mxu0 %v195
    %v247 = vpop.f32.mrf.mxu0
    %v248 = vadd.f32 0.0, %v247
    %v249 = vpop.f32.mrf.mxu0
    %v250 = vadd.f32 0.0, %v249
    %v251 = vpop.f32.mrf.mxu0
    %v252 = vadd.f32 0.0, %v251
    %v253 = vpop.f32.mrf.mxu0
    %v254 = vadd.f32 0.0, %v253
    %255 = vmatprep.mubr.bf16.mxu0 0
    %256 = vmatmul.mubr.bf16.gmra.mxu0 %v198
    %v257 = vpop.f32.mrf.mxu0
    %v258 = vadd.f32 0.0, %v257
    %v259 = vpop.f32.mrf.mxu0
    %v260 = vadd.f32 0.0, %v259
    %v261 = vpop.f32.mrf.mxu0
    %v262 = vadd.f32 0.0, %v261
    %v263 = vpop.f32.mrf.mxu0
    %v264 = vadd.f32 0.0, %v263
    %265 = vmatprep.mubr.bf16.mxu0 0
    %266 = vmatmul.mubr.bf16.gmra.mxu0 %v201
    %v267 = vpop.f32.mrf.mxu0
    %v268 = vadd.f32 0.0, %v267
    %v269 = vpop.f32.mrf.mxu0
    %v270 = vadd.f32 0.0, %v269
    %v271 = vpop.f32.mrf.mxu0
    %v272 = vadd.f32 0.0, %v271
    %v273 = vpop.f32.mrf.mxu0
    %v274 = vadd.f32 0.0, %v273
    %275 = vdwg.mxu0
    %v276 = vpack.c.bf16 %v242, %v238
    %v277 = vpack.c.bf16 %v244, %v240
    %v278 = vpack.c.bf16 %v252, %v248
    %v279 = vpack.c.bf16 %v254, %v250
    %v280 = vpack.c.bf16 %v262, %v258
    %v281 = vpack.c.bf16 %v264, %v260
    %v282 = vpack.c.bf16 %v272, %v268
    %v283 = vpack.c.bf16 %v274, %v270
    %v292 = vunpack.c.l.b16 %v276
    %v293 = vunpack.c.l.b16 %v277
    %v294 = vunpack.c.h.b16 %v276
    %v295 = vunpack.c.h.b16 %v277
    %v296 = vunpack.c.l.b16 %v278
    %v297 = vunpack.c.l.b16 %v279
    %v298 = vunpack.c.h.b16 %v278
    %v299 = vunpack.c.h.b16 %v279
    %v300 = vunpack.c.l.b16 %v280
    %v301 = vunpack.c.l.b16 %v281
    %v302 = vunpack.c.h.b16 %v280
    %v303 = vunpack.c.h.b16 %v281
    %v304 = vunpack.c.l.b16 %v282
    %v305 = vunpack.c.l.b16 %v283
    %v306 = vunpack.c.h.b16 %v282
    %v307 = vunpack.c.h.b16 %v283
    %v308 = vpack.c.b16 %v293, %v292
    %v309 = vpack.c.b16 %v295, %v294
    %v310 = vpack.c.b16 %v297, %v296
    %v311 = vpack.c.b16 %v299, %v298
    %v312 = vpack.c.b16 %v301, %v300
    %v313 = vpack.c.b16 %v303, %v302
    %v314 = vpack.c.b16 %v305, %v304
    %v315 = vpack.c.b16 %v307, %v306
    %324 = vst [vmem:[#allocation2] sm:$0xff] %v308
    %325 = vst [vmem:[#allocation2 + $0x8] sm:$0xff] %v309
    %326 = vst [vmem:[#allocation2 + $0x10] sm:$0xff] %v310
    %327 = vst [vmem:[#allocation2 + $0x18] sm:$0xff] %v311
    %328 = vst [vmem:[#allocation2 + $0x20] sm:$0xff] %v312
    %329 = vst [vmem:[#allocation2 + $0x28] sm:$0xff] %v313
    %330 = vst [vmem:[#allocation2 + $0x30] sm:$0xff] %v314
    %331 = vst [vmem:[#allocation2 + $0x38] sm:$0xff] %v315
    // Predicated region
    $region18: #{tpu_custom_call.1} parent=1 // pred_check
      _
    $region19: #{tpu_custom_call.1} parent=1 // pred_check_branch
      %333 = sbr.rel (0) target = $region21
    $region20: #{tpu_custom_call.1} parent=1 // pred_region
      %s335 = ssub.s32 1024, 1024
      %336 = vsyncadd [#allocation3], %s335
      %s337 = sshll.u32 [#allocation2], 4
      %s338 = int_to_ptr.vmem [resolvable:$true] %s337
      %343 = dma.vmem_to_hbm [thread:$0]  %s338, 1024, %s4, [#allocation3], 128, 128, 8
    $region21: #{tpu_custom_call.1} parent=1 // pred_fallthru
      _
    // Predicated region
    $region22: #{tpu_custom_call.1} parent=1 // pred_check
      _
    $region23: #{tpu_custom_call.1} parent=1 // pred_check_branch
      %345 = sbr.rel (0) target = $region25
    $region24: #{tpu_custom_call.1} parent=1 // pred_region
      %346 = dma.done [#allocation3], 1024
    $region25: #{tpu_custom_call.1} parent=1 // pred_fallthru
      _
    %347 = vsyncpa [#allocation3], 1

</llo_original>
